<compile_context>
chip_gen: v7x
topology: tpu7x:2x2x1
jax: 0.10.0
libtpu: 0.0.40
codegen_flags: <defaults>
</compile_context>

<pallas_src>
import functools

import jax
import jax.numpy as jnp
from jax.experimental import pallas as pl
from jax.experimental.pallas import tpu as pltpu

BN_EPS = 1e-5
DEFAULT_TILE_N = 1024  # rows per grid step; well under VMEM on v5e/v6e/v7x


def _round_up(n, m):
    return ((n + m - 1) // m) * m


def encoder_kernel(x_ref, counts_ref, w1_ref, b1_ref, wxf_ref, w2f_ref,
                   bout_ref, out_ref):
    # First MLP layer with BatchNorm pre-folded into (w1', b1'), then ReLU.
    h1 = jnp.dot(counts_ref[...], w1_ref[...],
                 preferred_element_type=jnp.float32) + b1_ref[...]
    h1 = jnp.maximum(h1, 0.0)

    # Fused output: linear_x and MLP layer 2 target disjoint column ranges of
    # the zero-padded [*, dim_emb] weights, so a sum reproduces the concat and
    # the output block is written in one dense (unmasked) pass.
    out = (jnp.dot(x_ref[...], wxf_ref[...], preferred_element_type=jnp.float32)
           + jnp.dot(h1, w2f_ref[...], preferred_element_type=jnp.float32)
           + bout_ref[...])
    out_ref[...] = out.astype(out_ref.dtype)


def prepare_fused_params(params):
    """Precompute batch-independent fused weights (done once, outside jit)."""
    dim_in, dim_x = params["wx"].shape
    dim_hid, dim_ct = params["w2"].shape
    dim_emb = dim_x + dim_ct
    wx_full = jnp.zeros((dim_in, dim_emb), jnp.float32).at[:, :dim_x].set(
        params["wx"].astype(jnp.float32))
    w2_full = jnp.zeros((dim_hid, dim_emb), jnp.float32).at[:, dim_x:].set(
        params["w2"].astype(jnp.float32))
    b_out = jnp.concatenate(
        [params["bx"], params["b2"]], axis=1).astype(jnp.float32)   # [1, dim_emb]
    fused = dict(params)
    fused["wx_full"] = wx_full
    fused["w2_full"] = w2_full
    fused["b_out"] = b_out
    return fused


@functools.partial(jax.jit, static_argnames=("tile_n",))
def mlp_node_count_encoder(x, counts, params, tile_n=DEFAULT_TILE_N):
    """Returns the new batch.x = cat([linear_x(x), encoder(BN(counts))], 1)."""
    N, dim_in = x.shape
    dim_ogct = counts.shape[1]
    dim_hid = params["w1"].shape[1]
    dim_emb = params["wx_full"].shape[1]

    # ---- Fold train-mode BatchNorm1d (biased batch variance) into layer 1 ----
    # TODO(synk): running_mean/running_var buffer updates (eval mode) are
    # framework state, not part of this forward kernel.
    counts_f32 = counts.astype(jnp.float32)
    mean = jnp.mean(counts_f32, axis=0)                               # [dim_ogct]
    var = jnp.mean((counts_f32 - mean) ** 2, axis=0)                  # biased
    scale = params["gamma"][0] * jax.lax.rsqrt(var + BN_EPS)          # [dim_ogct]
    shift = params["beta"][0] - mean * scale                          # [dim_ogct]
    w1p = scale[:, None] * params["w1"].astype(jnp.float32)           # [dim_ogct, dim_hid]
    b1p = (params["b1"].astype(jnp.float32)
           + (shift @ params["w1"].astype(jnp.float32))[None, :])     # [1, dim_hid]

    # ---- Row tiling over N ----
    tile_n = max(8, min(tile_n, _round_up(N, 8)))
    n_pad = _round_up(N, tile_n)
    x_f32 = x.astype(jnp.float32)
    if n_pad != N:
        x_f32 = jnp.pad(x_f32, ((0, n_pad - N), (0, 0)))
        counts_f32 = jnp.pad(counts_f32, ((0, n_pad - N), (0, 0)))
    grid = (n_pad // tile_n,)

    row_spec = lambda f: pl.BlockSpec((tile_n, f), lambda i: (i, 0))
    cst_spec = lambda r, c: pl.BlockSpec((r, c), lambda i: (0, 0))

    cost = pl.CostEstimate(
        flops=2 * N * (dim_ogct * dim_hid + dim_in * dim_emb + dim_hid * dim_emb),
        transcendentals=0,
        bytes_accessed=4 * N * (dim_in + dim_ogct + dim_emb)
        + 4 * (dim_ogct * dim_hid + dim_hid + dim_in * dim_emb
               + dim_hid * dim_emb + dim_emb),
    )

    out = pl.pallas_call(
        encoder_kernel,
        out_shape=jax.ShapeDtypeStruct((n_pad, dim_emb), jnp.float32),
        grid=grid,
        in_specs=[
            row_spec(dim_in),                 # x tile
            row_spec(dim_ogct),               # counts tile
            cst_spec(dim_ogct, dim_hid),      # w1' (BN folded)
            cst_spec(1, dim_hid),             # b1'
            cst_spec(dim_in, dim_emb),        # wx zero-padded to dim_emb
            cst_spec(dim_hid, dim_emb),       # w2 zero-padded to dim_emb
            cst_spec(1, dim_emb),             # fused output bias
        ],
        out_specs=row_spec(dim_emb),
        compiler_params=pltpu.CompilerParams(
            dimension_semantics=("parallel",)),
        cost_estimate=cost,
    )(x_f32, counts_f32, w1p, b1p,
      params["wx_full"], params["w2_full"], params["b_out"])

    return out[:N]


def _linear_init(key, fan_in, fan_out):
    """PyTorch nn.Linear default init: U(-1/sqrt(fan_in), 1/sqrt(fan_in))."""
    kw, kb = jax.random.split(key)
    bound = 1.0 / jnp.sqrt(fan_in)
    w = jax.random.uniform(kw, (fan_in, fan_out), jnp.float32, -bound, bound)
    b = jax.random.uniform(kb, (1, fan_out), jnp.float32, -bound, bound)
    return w, b


def make_params(key, dim_in, dim_emb, dim_ct, dim_ogct, dim_hid):
    k1, k2, k3 = jax.random.split(key, 3)
    wx, bx = _linear_init(k1, dim_in, dim_emb - dim_ct)    # linear_x
    w1, b1 = _linear_init(k2, dim_ogct, dim_hid)           # MLP layer 1
    w2, b2 = _linear_init(k3, dim_hid, dim_ct)             # MLP layer 2 (plain last)
    return {
        "wx": wx, "bx": bx,
        "gamma": jnp.ones((1, dim_ogct), jnp.float32),     # BatchNorm1d weight
        "beta": jnp.zeros((1, dim_ogct), jnp.float32),     # BatchNorm1d bias
        "w1": w1, "b1": b1,
        "w2": w2, "b2": b2,
    }


def reference(x, counts, params):
    """Un-fused, un-tiled reference matching the PyTorch forward."""
    mean = jnp.mean(counts, axis=0, keepdims=True)
    var = jnp.mean((counts - mean) ** 2, axis=0, keepdims=True)
    cn = (counts - mean) * jax.lax.rsqrt(var + BN_EPS)
    cn = cn * params["gamma"] + params["beta"]
    h1 = jnp.maximum(cn @ params["w1"] + params["b1"], 0.0)
    ce = h1 @ params["w2"] + params["b2"]
    h = x @ params["wx"] + params["bx"]
    return jnp.concatenate([h, ce], axis=-1)


if __name__ == "__main__":
    # cfg-equivalent hyperparameters (small, synthetic)
    N = 32          # number of nodes in the batch
    dim_in = 4      # cfg.share.dim_in
    dim_emb = 32    # desired embedding size
    dim_ct = 8      # cfg.ctenc_NodeCountEnc.dim_ct
    dim_ogct = 6    # cfg.ctenc_NodeCountEnc.dim_ogct
    dim_hid = 16    # cfg.ctenc_NodeCountEnc.dim_hid (n_layers=2, dropout=0)

    key = jax.random.PRNGKey(0)
    kx, kc, kp = jax.random.split(key, 3)
    x = jax.random.normal(kx, (N, dim_in), jnp.float32)            # batch.x
    counts = jax.random.normal(kc, (N, dim_ogct), jnp.float32)     # batch.counts
    params = make_params(kp, dim_in, dim_emb, dim_ct, dim_ogct, dim_hid)
    fused_params = prepare_fused_params(params)

    out = mlp_node_count_encoder(x, counts, fused_params)
    out = jax.block_until_ready(out)

    ref = reference(x, counts, params)
    assert out.shape == (N, dim_emb)
    assert jnp.allclose(out, ref, atol=1e-4, rtol=1e-4), "mismatch vs reference"
    # TODO(synk): pass_as_var just re-exposes count_enc on the batch object;
    # it is pure Python attribute plumbing and has no kernel equivalent.
    print("KERNEL_OK")
</pallas_src>

<mosaic_0001>
module attributes {stable_mosaic.version = 11 : i64} {
  func.func @encoder_kernel(%arg0: i32, %arg1: memref<32x4xf32, #tpu.memory_space<vmem>>, %arg2: memref<32x6xf32, #tpu.memory_space<vmem>>, %arg3: memref<6x16xf32, #tpu.memory_space<vmem>>, %arg4: memref<1x16xf32, #tpu.memory_space<vmem>>, %arg5: memref<4x32xf32, #tpu.memory_space<vmem>>, %arg6: memref<16x32xf32, #tpu.memory_space<vmem>>, %arg7: memref<1x32xf32, #tpu.memory_space<vmem>>, %arg8: memref<32x32xf32, #tpu.memory_space<vmem>>) attributes {dimension_semantics = [#tpu.dimension_semantics<parallel>], iteration_bounds = array<i64: 1>, scalar_prefetch = 0 : i64, scratch_operands = 0 : i64, tpu.core_type = #tpu.core_type<tc>, window_params = [{transform_indices = @transform_0, window_bounds = array<i64: 32, 4>}, {transform_indices = @transform_1, window_bounds = array<i64: 32, 6>}, {pipeline_mode = #tpu.pipeline_mode<synchronous>, transform_indices = @transform_2, window_bounds = array<i64: 6, 16>}, {pipeline_mode = #tpu.pipeline_mode<synchronous>, transform_indices = @transform_3, window_bounds = array<i64: 1, 16>}, {pipeline_mode = #tpu.pipeline_mode<synchronous>, transform_indices = @transform_4, window_bounds = array<i64: 4, 32>}, {pipeline_mode = #tpu.pipeline_mode<synchronous>, transform_indices = @transform_5, window_bounds = array<i64: 16, 32>}, {pipeline_mode = #tpu.pipeline_mode<synchronous>, transform_indices = @transform_6, window_bounds = array<i64: 1, 32>}, {transform_indices = @transform_7, window_bounds = array<i64: 32, 32>}]} {
    %c0 = arith.constant 0 : index
    %c0_0 = arith.constant 0 : index
    %0 = vector.load %arg2[%c0, %c0_0] : memref<32x6xf32, #tpu.memory_space<vmem>>, vector<32x6xf32>
    %c0_1 = arith.constant 0 : index
    %c0_2 = arith.constant 0 : index
    %1 = vector.load %arg3[%c0_1, %c0_2] : memref<6x16xf32, #tpu.memory_space<vmem>>, vector<6x16xf32>
    %cst = arith.constant dense<0.000000e+00> : vector<32x16xf32>
    %2 = tpu.matmul %0, %1, %cst {dimension_numbers = #tpu.dot_dimension_numbers<[1], [0], [0], [1], [0, 0, 1, 1], [], []>} : vector<32x6xf32>, vector<6x16xf32>, vector<32x16xf32> -> vector<32x16xf32>
    %c0_3 = arith.constant 0 : index
    %c0_4 = arith.constant 0 : index
    %3 = vector.load %arg4[%c0_3, %c0_4] : memref<1x16xf32, #tpu.memory_space<vmem>>, vector<1x16xf32>
    %4 = vector.broadcast %3 : vector<1x16xf32> to vector<32x16xf32>
    %5 = arith.addf %2, %4 : vector<32x16xf32>
    %cst_5 = arith.constant 0.000000e+00 : f32
    %6 = vector.broadcast %cst_5 : f32 to vector<32x16xf32>
    %7 = arith.maximumf %5, %6 : vector<32x16xf32>
    %c0_6 = arith.constant 0 : index
    %c0_7 = arith.constant 0 : index
    %8 = vector.load %arg1[%c0_6, %c0_7] : memref<32x4xf32, #tpu.memory_space<vmem>>, vector<32x4xf32>
    %c0_8 = arith.constant 0 : index
    %c0_9 = arith.constant 0 : index
    %9 = vector.load %arg5[%c0_8, %c0_9] : memref<4x32xf32, #tpu.memory_space<vmem>>, vector<4x32xf32>
    %cst_10 = arith.constant dense<0.000000e+00> : vector<32x32xf32>
    %10 = tpu.matmul %8, %9, %cst_10 {dimension_numbers = #tpu.dot_dimension_numbers<[1], [0], [0], [1], [0, 0, 1, 1], [], []>} : vector<32x4xf32>, vector<4x32xf32>, vector<32x32xf32> -> vector<32x32xf32>
    %c0_11 = arith.constant 0 : index
    %c0_12 = arith.constant 0 : index
    %11 = vector.load %arg6[%c0_11, %c0_12] : memref<16x32xf32, #tpu.memory_space<vmem>>, vector<16x32xf32>
    %cst_13 = arith.constant dense<0.000000e+00> : vector<32x32xf32>
    %12 = tpu.matmul %7, %11, %cst_13 {dimension_numbers = #tpu.dot_dimension_numbers<[1], [0], [0], [1], [0, 0, 1, 1], [], []>} : vector<32x16xf32>, vector<16x32xf32>, vector<32x32xf32> -> vector<32x32xf32>
    %13 = arith.addf %10, %12 : vector<32x32xf32>
    %c0_14 = arith.constant 0 : index
    %c0_15 = arith.constant 0 : index
    %14 = vector.load %arg7[%c0_14, %c0_15] : memref<1x32xf32, #tpu.memory_space<vmem>>, vector<1x32xf32>
    %15 = vector.broadcast %14 : vector<1x32xf32> to vector<32x32xf32>
    %16 = arith.addf %13, %15 : vector<32x32xf32>
    %c0_16 = arith.constant 0 : index
    %c0_17 = arith.constant 0 : index
    %17 = vector.load %arg8[%c0_16, %c0_17] : memref<32x32xf32, #tpu.memory_space<vmem>>, vector<32x32xf32>
    tpu.vector_store %arg8[%c0_16, %c0_17], %16 {strides = array<i32>} : memref<32x32xf32, #tpu.memory_space<vmem>>, vector<32x32xf32>,
    return
  }
  func.func @transform_0(%arg0: i32) -> (i32, i32) {
    %c0_i32 = arith.constant 0 : i32
    %c0_i32_0 = arith.constant 0 : i32
    return %arg0, %c0_i32 : i32, i32
  }
  func.func @transform_1(%arg0: i32) -> (i32, i32) {
    %c0_i32 = arith.constant 0 : i32
    %c0_i32_0 = arith.constant 0 : i32
    return %arg0, %c0_i32 : i32, i32
  }
  func.func @transform_2(%arg0: i32) -> (i32, i32) {
    %c0_i32 = arith.constant 0 : i32
    %c0_i32_0 = arith.constant 0 : i32
    %c0_i32_1 = arith.constant 0 : i32
    return %c0_i32, %c0_i32_0 : i32, i32
  }
  func.func @transform_3(%arg0: i32) -> (i32, i32) {
    %c0_i32 = arith.constant 0 : i32
    %c0_i32_0 = arith.constant 0 : i32
    %c0_i32_1 = arith.constant 0 : i32
    return %c0_i32, %c0_i32_0 : i32, i32
  }
  func.func @transform_4(%arg0: i32) -> (i32, i32) {
    %c0_i32 = arith.constant 0 : i32
    %c0_i32_0 = arith.constant 0 : i32
    %c0_i32_1 = arith.constant 0 : i32
    return %c0_i32, %c0_i32_0 : i32, i32
  }
  func.func @transform_5(%arg0: i32) -> (i32, i32) {
    %c0_i32 = arith.constant 0 : i32
    %c0_i32_0 = arith.constant 0 : i32
    %c0_i32_1 = arith.constant 0 : i32
    return %c0_i32, %c0_i32_0 : i32, i32
  }
  func.func @transform_6(%arg0: i32) -> (i32, i32) {
    %c0_i32 = arith.constant 0 : i32
    %c0_i32_0 = arith.constant 0 : i32
    %c0_i32_1 = arith.constant 0 : i32
    return %c0_i32, %c0_i32_0 : i32, i32
  }
  func.func @transform_7(%arg0: i32) -> (i32, i32) {
    %c0_i32 = arith.constant 0 : i32
    %c0_i32_0 = arith.constant 0 : i32
    return %arg0, %c0_i32 : i32, i32
  }
}

</mosaic_0001>

<llo_original>
// kernel: mlp_node_count_encoder.1
$region0: #{mlp_node_count_encoder.1}
  #allocation0 [shape = 'u32[]', space=smem, size = 0x4, offset = 0x4, fixed_abs, tag = 'smem constant byte address 0x4 - core index']
  #allocation1 [shape = 'u32[144,128]{1,0:T(1,128)}', space=vmem, size = 0x12000, scoped, tag = 'internal scratch']
  %s0 = inlined_call_operand.vmem [shape: f32[32,4], index: 0, kind: input, shape index: {}]
  %s1 = inlined_call_operand.vmem [shape: f32[32,6], index: 1, kind: input, shape index: {}]
  %s2 = inlined_call_operand.vmem [shape: f32[6,16], index: 2, kind: input, shape index: {}]
  %s3 = inlined_call_operand.vmem [shape: f32[1,16], index: 3, kind: input, shape index: {}]
  %s4 = inlined_call_operand.vmem [shape: f32[4,32], index: 4, kind: input, shape index: {}]
  %s5 = inlined_call_operand.vmem [shape: f32[16,32], index: 5, kind: input, shape index: {}]
  %s6 = inlined_call_operand.vmem [shape: f32[1,32], index: 6, kind: input, shape index: {}]
  %s7 = inlined_call_operand.hbm [shape: f32[32,32], index: 7, kind: output, shape index: {}]
  %s8 = sld [smem:[#allocation0]]
  $region38: #{mlp_node_count_encoder.1} parent=0
    _
  %s10 = ssub.s32 1, %s8
  %s11 = scalar_select 0, %s10, %s8
  $region1: #{mlp_node_count_encoder.1} parent=0
    #allocation2 [shape = 'u8[16384]{0}', space=vmem, size = 0x4000, scoped, tag = 'output window, operand 0, single buffered']
    #allocation3 [shape = 's32[1]{0}', space=sflag, size = 0x4, scoped, tag = 'scoped memory for mlp_node_count_encoder.1']
    %12 = vsyncpa [#allocation3], 0
    // Predicated region
    $region2: #{mlp_node_count_encoder.1} parent=1 // pred_check
      _
    $region3: #{mlp_node_count_encoder.1} parent=1 // pred_check_branch
      %14 = sbr.rel (0) target = $region5
    $region4: #{mlp_node_count_encoder.1} parent=1 // pred_region
      _
    $region5: #{mlp_node_count_encoder.1} parent=1 // pred_fallthru
      _
    // Predicated region
    $region6: #{mlp_node_count_encoder.1} parent=1 // pred_check
      _
    $region7: #{mlp_node_count_encoder.1} parent=1 // pred_check_branch
      %16 = sbr.rel (0) target = $region9
    $region8: #{mlp_node_count_encoder.1} parent=1 // pred_region
      _
    $region9: #{mlp_node_count_encoder.1} parent=1 // pred_fallthru
      _
    // Predicated region
    $region10: #{mlp_node_count_encoder.1} parent=1 // pred_check
      _
    $region11: #{mlp_node_count_encoder.1} parent=1 // pred_check_branch
      %18 = sbr.rel (0) target = $region13
    $region12: #{mlp_node_count_encoder.1} parent=1 // pred_region
      _
    $region13: #{mlp_node_count_encoder.1} parent=1 // pred_fallthru
      _
    // Predicated region
    $region14: #{mlp_node_count_encoder.1} parent=1 // pred_check
      _
    $region15: #{mlp_node_count_encoder.1} parent=1 // pred_check_branch
      %20 = sbr.rel (0) target = $region17
    $region16: #{mlp_node_count_encoder.1} parent=1 // pred_region
      _
    $region17: #{mlp_node_count_encoder.1} parent=1 // pred_fallthru
      _
    // Predicated region
    $region18: #{mlp_node_count_encoder.1} parent=1 // pred_check
      _
    $region19: #{mlp_node_count_encoder.1} parent=1 // pred_check_branch
      %22 = sbr.rel (0) target = $region21
    $region20: #{mlp_node_count_encoder.1} parent=1 // pred_region
      _
    $region21: #{mlp_node_count_encoder.1} parent=1 // pred_fallthru
      _
    // Predicated region
    $region22: #{mlp_node_count_encoder.1} parent=1 // pred_check
      _
    $region23: #{mlp_node_count_encoder.1} parent=1 // pred_check_branch
      %24 = sbr.rel (0) target = $region25
    $region24: #{mlp_node_count_encoder.1} parent=1 // pred_region
      _
    $region25: #{mlp_node_count_encoder.1} parent=1 // pred_fallthru
      _
    // Predicated region
    $region26: #{mlp_node_count_encoder.1} parent=1 // pred_check
      _
    $region27: #{mlp_node_count_encoder.1} parent=1 // pred_check_branch
      %26 = sbr.rel (0) target = $region29
    $region28: #{mlp_node_count_encoder.1} parent=1 // pred_region
      _
    $region29: #{mlp_node_count_encoder.1} parent=1 // pred_fallthru
      _
    %v27 = vld [vmem:[%s1] sm:$0xff]
    %v28 = vld [vmem:[%s1 + $0x8] sm:$0xff]
    %v29 = vld [vmem:[%s1 + $0x10] sm:$0xff]
    %v30 = vld [vmem:[%s1 + $0x18] sm:$0xff]
    %v31 = vld [vmem:[%s2] sm:$0x3f]
    %v32 = vld [vmem:[%s3] sm:$0x1]
    %v34 = vlaneseq
    %v35 = vshrl.u32 %v34, 7
    %v36 = vsub.s32 0, %v35
    %v37 = vrot.slane %v32, %v36
    %vm39 = vcmask 48128
    %v41 = vsel %vm39, %v27, 0
    %v44 = vsel %vm39, %v28, 0
    %v47 = vsel %vm39, %v29, 0
    %v50 = vsel %vm39, %v30, 0
    %vm52 = vcmask 1045504
    %v54 = vsel %vm52, %v31, 0
    %56 = vmatprep.subr.mxu0 0.0
    %57 = vmatpush1.msra.mxu0 %v54
    %58 = vmatprep.subr.mxu0 0.0
    %59 = vmatpush1.msra.mxu0 0.0
    %60 = vmatprep.subr.mxu0 0.0
    %61 = vmatpush1.msra.mxu0 0.0
    %62 = vmatprep.subr.mxu0 0.0
    %63 = vmatpush1.msra.mxu0 0.0
    %64 = vmatprep.subr.mxu0 0.0
    %65 = vmatpush1.msra.mxu0 0.0
    %66 = vmatprep.subr.mxu0 0.0
    %67 = vmatpush1.msra.mxu0 0.0
    %68 = vmatprep.subr.mxu0 0.0
    %69 = vmatpush1.msra.mxu0 0.0
    %70 = vmatprep.subr.mxu0 0.0
    %71 = vmatpush1.msra.mxu0 0.0
    %72 = vmatprep.subr.mxu0 0.0
    %73 = vmatpush1.msra.mxu0 0.0
    %74 = vmatprep.subr.mxu0 0.0
    %75 = vmatpush1.msra.mxu0 0.0
    %76 = vmatprep.subr.mxu0 0.0
    %77 = vmatpush1.msra.mxu0 0.0
    %78 = vmatprep.subr.mxu0 0.0
    %79 = vmatpush1.msra.mxu0 0.0
    %80 = vmatprep.subr.mxu0 0.0
    %81 = vmatpush1.msra.mxu0 0.0
    %82 = vmatprep.subr.mxu0 0.0
    %83 = vmatpush1.msra.mxu0 0.0
    %84 = vmatprep.subr.mxu0 0.0
    %85 = vmatpush1.msra.mxu0 0.0
    %86 = vmatprep.subr.mxu0 0.0
    %87 = vmatpush1.msra.mxu0 0.0
    %88 = vmatprep.subr.mxu0 0.0
    %89 = vmatpush1.msra.mxu0 0.0
    %90 = vmatprep.subr.mxu0 0.0
    %91 = vmatpush1.msra.mxu0 0.0
    %92 = vmatprep.subr.mxu0 0.0
    %93 = vmatpush1.msra.mxu0 0.0
    %94 = vmatprep.subr.mxu0 0.0
    %95 = vmatpush1.msra.mxu0 0.0
    %96 = vmatprep.subr.mxu0 0.0
    %97 = vmatpush1.msra.mxu0 0.0
    %98 = vmatprep.subr.mxu0 0.0
    %99 = vmatpush1.msra.mxu0 0.0
    %100 = vmatprep.subr.mxu0 0.0
    %101 = vmatpush1.msra.mxu0 0.0
    %102 = vmatprep.subr.mxu0 0.0
    %103 = vmatpush1.msra.mxu0 0.0
    %104 = vmatprep.subr.mxu0 0.0
    %105 = vmatpush1.msra.mxu0 0.0
    %106 = vmatprep.subr.mxu0 0.0
    %107 = vmatpush1.msra.mxu0 0.0
    %108 = vmatprep.subr.mxu0 0.0
    %109 = vmatpush1.msra.mxu0 0.0
    %110 = vmatprep.subr.mxu0 0.0
    %111 = vmatpush1.msra.mxu0 0.0
    %112 = vmatprep.subr.mxu0 0.0
    %113 = vmatpush1.msra.mxu0 0.0
    %114 = vmatprep.subr.mxu0 0.0
    %115 = vmatpush1.msra.mxu0 0.0
    %116 = vmatprep.subr.mxu0 0.0
    %117 = vmatpush1.msra.mxu0 0.0
    %118 = vmatprep.subr.mxu0 0.0
    %119 = vmatpush1.msra.mxu0 0.0
    %120 = vmatprep.mubr.f32.mxu0 0.0
    %121 = vmatmul.mubr.f32.gmra.mrb[0].mxu0 %v41
    %v122 = vpop.f32.mrb[0].mxu0
    %v123 = vadd.f32 %v37, %v122
    %v124 = vpop.f32.mrb[0].mxu0
    %125 = vmatprep.mubr.f32.mxu0 0.0
    %126 = vmatmul.mubr.f32.gmra.mrb[0].mxu0 %v44
    %v127 = vpop.f32.mrb[0].mxu0
    %v128 = vadd.f32 %v37, %v127
    %v129 = vpop.f32.mrb[0].mxu0
    %130 = vmatprep.mubr.f32.mxu0 0.0
    %131 = vmatmul.mubr.f32.gmra.mrb[0].mxu0 %v47
    %v132 = vpop.f32.mrb[0].mxu0
    %v133 = vadd.f32 %v37, %v132
    %v134 = vpop.f32.mrb[0].mxu0
    %135 = vmatprep.mubr.f32.mxu0 0.0
    %136 = vmatmul.mubr.f32.gmra.mrb[0].mxu0 %v50
    %v137 = vpop.f32.mrb[0].mxu0
    %v138 = vadd.f32 %v37, %v137
    %v139 = vpop.f32.mrb[0].mxu0
    %140 = vdwg.mxu0
    %v141 = vmax.f32 %v123, 0.0
    %v142 = vmax.f32 %v128, 0.0
    %v143 = vmax.f32 %v133, 0.0
    %v144 = vmax.f32 %v138, 0.0
    %v145 = vld [vmem:[%s0] sm:$0xff]
    %v146 = vld [vmem:[%s0 + $0x8] sm:$0xff]
    %v147 = vld [vmem:[%s0 + $0x10] sm:$0xff]
    %v148 = vld [vmem:[%s0 + $0x18] sm:$0xff]
    %v149 = vld [vmem:[%s4] sm:$0xf]
    %v150 = vld [vmem:[%s5] sm:$0xff]
    %v151 = vld [vmem:[%s5 + $0x8] sm:$0xff]
    %vm152 = vcmask 130048
    %v154 = vsel %vm152, %v141, 0
    %v157 = vsel %vm152, %v142, 0
    %v160 = vsel %vm152, %v143, 0
    %v163 = vsel %vm152, %v144, 0
    %165 = vmatprep.subr.mxu0 0.0
    %166 = vmatpush1.msra.mxu0 %v150
    %167 = vmatprep.subr.mxu0 0.0
    %168 = vmatpush1.msra.mxu0 %v151
    %169 = vmatprep.subr.mxu0 0.0
    %170 = vmatpush1.msra.mxu0 0.0
    %171 = vmatprep.subr.mxu0 0.0
    %172 = vmatpush1.msra.mxu0 0.0
    %173 = vmatprep.subr.mxu0 0.0
    %174 = vmatpush1.msra.mxu0 0.0
    %175 = vmatprep.subr.mxu0 0.0
    %176 = vmatpush1.msra.mxu0 0.0
    %177 = vmatprep.subr.mxu0 0.0
    %178 = vmatpush1.msra.mxu0 0.0
    %179 = vmatprep.subr.mxu0 0.0
    %180 = vmatpush1.msra.mxu0 0.0
    %181 = vmatprep.subr.mxu0 0.0
    %182 = vmatpush1.msra.mxu0 0.0
    %183 = vmatprep.subr.mxu0 0.0
    %184 = vmatpush1.msra.mxu0 0.0
    %185 = vmatprep.subr.mxu0 0.0
    %186 = vmatpush1.msra.mxu0 0.0
    %187 = vmatprep.subr.mxu0 0.0
    %188 = vmatpush1.msra.mxu0 0.0
    %189 = vmatprep.subr.mxu0 0.0
    %190 = vmatpush1.msra.mxu0 0.0
    %191 = vmatprep.subr.mxu0 0.0
    %192 = vmatpush1.msra.mxu0 0.0
    %193 = vmatprep.subr.mxu0 0.0
    %194 = vmatpush1.msra.mxu0 0.0
    %195 = vmatprep.subr.mxu0 0.0
    %196 = vmatpush1.msra.mxu0 0.0
    %197 = vmatprep.subr.mxu0 0.0
    %198 = vmatpush1.msra.mxu0 0.0
    %199 = vmatprep.subr.mxu0 0.0
    %200 = vmatpush1.msra.mxu0 0.0
    %201 = vmatprep.subr.mxu0 0.0
    %202 = vmatpush1.msra.mxu0 0.0
    %203 = vmatprep.subr.mxu0 0.0
    %204 = vmatpush1.msra.mxu0 0.0
    %205 = vmatprep.subr.mxu0 0.0
    %206 = vmatpush1.msra.mxu0 0.0
    %207 = vmatprep.subr.mxu0 0.0
    %208 = vmatpush1.msra.mxu0 0.0
    %209 = vmatprep.subr.mxu0 0.0
    %210 = vmatpush1.msra.mxu0 0.0
    %211 = vmatprep.subr.mxu0 0.0
    %212 = vmatpush1.msra.mxu0 0.0
    %213 = vmatprep.subr.mxu0 0.0
    %214 = vmatpush1.msra.mxu0 0.0
    %215 = vmatprep.subr.mxu0 0.0
    %216 = vmatpush1.msra.mxu0 0.0
    %217 = vmatprep.subr.mxu0 0.0
    %218 = vmatpush1.msra.mxu0 0.0
    %219 = vmatprep.subr.mxu0 0.0
    %220 = vmatpush1.msra.mxu0 0.0
    %221 = vmatprep.subr.mxu0 0.0
    %222 = vmatpush1.msra.mxu0 0.0
    %223 = vmatprep.subr.mxu0 0.0
    %224 = vmatpush1.msra.mxu0 0.0
    %225 = vmatprep.subr.mxu0 0.0
    %226 = vmatpush1.msra.mxu0 0.0
    %227 = vmatprep.subr.mxu0 0.0
    %228 = vmatpush1.msra.mxu0 0.0
    %229 = vmatprep.mubr.f32.mxu0 0.0
    %230 = vmatmul.mubr.f32.gmra.mrb[0].mxu0 %v154
    %v231 = vpop.f32.mrb[0].mxu0
    %v232 = vadd.f32 0.0, %v231
    %v233 = vpop.f32.mrb[0].mxu0
    %234 = vmatprep.mubr.f32.mxu0 0.0
    %235 = vmatmul.mubr.f32.gmra.mrb[0].mxu0 %v157
    %v236 = vpop.f32.mrb[0].mxu0
    %v237 = vadd.f32 0.0, %v236
    %v238 = vpop.f32.mrb[0].mxu0
    %239 = vmatprep.mubr.f32.mxu0 0.0
    %240 = vmatmul.mubr.f32.gmra.mrb[0].mxu0 %v160
    %v241 = vpop.f32.mrb[0].mxu0
    %v242 = vadd.f32 0.0, %v241
    %v243 = vpop.f32.mrb[0].mxu0
    %244 = vmatprep.mubr.f32.mxu0 0.0
    %245 = vmatmul.mubr.f32.gmra.mrb[0].mxu0 %v163
    %v246 = vpop.f32.mrb[0].mxu0
    %v247 = vadd.f32 0.0, %v246
    %v248 = vpop.f32.mrb[0].mxu0
    %249 = vdwg.mxu0
    %vm250 = vcmask 31744
    %v252 = vsel %vm250, %v145, 0
    %v255 = vsel %vm250, %v146, 0
    %v258 = vsel %vm250, %v147, 0
    %v261 = vsel %vm250, %v148, 0
    %vm263 = vcmask 1043456
    %v265 = vsel %vm263, %v149, 0
    %267 = vmatprep.subr.mxu0 0.0
    %268 = vmatpush1.msra.mxu0 %v265
    %269 = vmatprep.subr.mxu0 0.0
    %270 = vmatpush1.msra.mxu0 0.0
    %271 = vmatprep.subr.mxu0 0.0
    %272 = vmatpush1.msra.mxu0 0.0
    %273 = vmatprep.subr.mxu0 0.0
    %274 = vmatpush1.msra.mxu0 0.0
    %275 = vmatprep.subr.mxu0 0.0
    %276 = vmatpush1.msra.mxu0 0.0
    %277 = vmatprep.subr.mxu0 0.0
    %278 = vmatpush1.msra.mxu0 0.0
    %279 = vmatprep.subr.mxu0 0.0
    %280 = vmatpush1.msra.mxu0 0.0
    %281 = vmatprep.subr.mxu0 0.0
    %282 = vmatpush1.msra.mxu0 0.0
    %283 = vmatprep.subr.mxu0 0.0
    %284 = vmatpush1.msra.mxu0 0.0
    %285 = vmatprep.subr.mxu0 0.0
    %286 = vmatpush1.msra.mxu0 0.0
    %287 = vmatprep.subr.mxu0 0.0
    %288 = vmatpush1.msra.mxu0 0.0
    %289 = vmatprep.subr.mxu0 0.0
    %290 = vmatpush1.msra.mxu0 0.0
    %291 = vmatprep.subr.mxu0 0.0
    %292 = vmatpush1.msra.mxu0 0.0
    %293 = vmatprep.subr.mxu0 0.0
    %294 = vmatpush1.msra.mxu0 0.0
    %295 = vmatprep.subr.mxu0 0.0
    %296 = vmatpush1.msra.mxu0 0.0
    %297 = vmatprep.subr.mxu0 0.0
    %298 = vmatpush1.msra.mxu0 0.0
    %299 = vmatprep.subr.mxu0 0.0
    %300 = vmatpush1.msra.mxu0 0.0
    %301 = vmatprep.subr.mxu0 0.0
    %302 = vmatpush1.msra.mxu0 0.0
    %303 = vmatprep.subr.mxu0 0.0
    %304 = vmatpush1.msra.mxu0 0.0
    %305 = vmatprep.subr.mxu0 0.0
    %306 = vmatpush1.msra.mxu0 0.0
    %307 = vmatprep.subr.mxu0 0.0
    %308 = vmatpush1.msra.mxu0 0.0
    %309 = vmatprep.subr.mxu0 0.0
    %310 = vmatpush1.msra.mxu0 0.0
    %311 = vmatprep.subr.mxu0 0.0
    %312 = vmatpush1.msra.mxu0 0.0
    %313 = vmatprep.subr.mxu0 0.0
    %314 = vmatpush1.msra.mxu0 0.0
    %315 = vmatprep.subr.mxu0 0.0
    %316 = vmatpush1.msra.mxu0 0.0
    %317 = vmatprep.subr.mxu0 0.0
    %318 = vmatpush1.msra.mxu0 0.0
    %319 = vmatprep.subr.mxu0 0.0
    %320 = vmatpush1.msra.mxu0 0.0
    %321 = vmatprep.subr.mxu0 0.0
    %322 = vmatpush1.msra.mxu0 0.0
    %323 = vmatprep.subr.mxu0 0.0
    %324 = vmatpush1.msra.mxu0 0.0
    %325 = vmatprep.subr.mxu0 0.0
    %326 = vmatpush1.msra.mxu0 0.0
    %327 = vmatprep.subr.mxu0 0.0
    %328 = vmatpush1.msra.mxu0 0.0
    %329 = vmatprep.subr.mxu0 0.0
    %330 = vmatpush1.msra.mxu0 0.0
    %331 = vmatprep.mubr.f32.mxu0 0.0
    %332 = vmatmul.mubr.f32.gmra.mrb[0].mxu0 %v252
    %v333 = vpop.f32.mrb[0].mxu0
    %v334 = vadd.f32 %v232, %v333
    %v335 = vpop.f32.mrb[0].mxu0
    %336 = vmatprep.mubr.f32.mxu0 0.0
    %337 = vmatmul.mubr.f32.gmra.mrb[0].mxu0 %v255
    %v338 = vpop.f32.mrb[0].mxu0
    %v339 = vadd.f32 %v237, %v338
    %v340 = vpop.f32.mrb[0].mxu0
    %341 = vmatprep.mubr.f32.mxu0 0.0
    %342 = vmatmul.mubr.f32.gmra.mrb[0].mxu0 %v258
    %v343 = vpop.f32.mrb[0].mxu0
    %v344 = vadd.f32 %v242, %v343
    %v345 = vpop.f32.mrb[0].mxu0
    %346 = vmatprep.mubr.f32.mxu0 0.0
    %347 = vmatmul.mubr.f32.gmra.mrb[0].mxu0 %v261
    %v348 = vpop.f32.mrb[0].mxu0
    %v349 = vadd.f32 %v247, %v348
    %v350 = vpop.f32.mrb[0].mxu0
    %351 = vdwg.mxu0
    %v352 = vld [vmem:[%s6] sm:$0x1]
    %v354 = vlaneseq
    %v355 = vshrl.u32 %v354, 7
    %v356 = vsub.s32 0, %v355
    %v357 = vrot.slane %v352, %v356
    %v359 = vadd.f32 %v334, %v357
    %v360 = vadd.f32 %v339, %v357
    %v361 = vadd.f32 %v344, %v357
    %v362 = vadd.f32 %v349, %v357
    %vm363 = vcmask 261120
    %364 = vst.msk [vmem:[#allocation2] sm:$0xff] %vm363, %v359
    %365 = vst.msk [vmem:[#allocation2 + $0x8] sm:$0xff] %vm363, %v360
    %366 = vst.msk [vmem:[#allocation2 + $0x10] sm:$0xff] %vm363, %v361
    %367 = vst.msk [vmem:[#allocation2 + $0x18] sm:$0xff] %vm363, %v362
    // Predicated region
    $region30: #{mlp_node_count_encoder.1} parent=1 // pred_check
      _
    $region31: #{mlp_node_count_encoder.1} parent=1 // pred_check_branch
      %369 = sbr.rel (0) target = $region33
    $region32: #{mlp_node_count_encoder.1} parent=1 // pred_region
      %s371 = ssub.s32 512, 512
      %372 = vsyncadd [#allocation3], %s371
      %s373 = sshll.u32 [#allocation2], 4
      %s374 = int_to_ptr.vmem [resolvable:$true] %s373
      %379 = dma.vmem_to_hbm [thread:$0]  %s374, 512, %s7, [#allocation3], 128, 128, 8
    $region33: #{mlp_node_count_encoder.1} parent=1 // pred_fallthru
      _
    // Predicated region
    $region34: #{mlp_node_count_encoder.1} parent=1 // pred_check
      _
    $region35: #{mlp_node_count_encoder.1} parent=1 // pred_check_branch
      %381 = sbr.rel (0) target = $region37
    $region36: #{mlp_node_count_encoder.1} parent=1 // pred_region
      %382 = dma.done [#allocation3], 512
    $region37: #{mlp_node_count_encoder.1} parent=1 // pred_fallthru
      _
    %383 = vsyncpa [#allocation3], 1

</llo_original>
